<compile_context>
chip_gen: v5e
topology: v5e:2x2
jax: 0.10.0
libtpu: 0.0.40
codegen_flags: <defaults>
</compile_context>

<pallas_src>
import jax
import jax.numpy as jnp
from jax.experimental import pallas as pl
from jax.experimental.pallas import tpu as pltpu


# ---------------------------------------------------------------------------
# Pallas kernel: fused encoder + decoder MLP (one batch tile per grid step)
# ---------------------------------------------------------------------------
def autoencoder_kernel(
    x_ref,              # [TB, CHW]  flattened image tile        (f32)
    a_ref,              # [TB, A]    action tile                 (f32)
    w1x_ref, w1a_ref,   # [CHW, H1], [A, H1]                     (bf16)
    b1_ref,             # [1, H1]                                (f32)
    w2_ref, b2_ref,     # [H1, L],   [1, L]                      (bf16 / f32)
    w3_ref, b3_ref,     # [L, H1],   [1, H1]                     (bf16 / f32)
    w4_ref, b4_ref,     # [H1, Dout],[1, Dout]                   (bf16 / f32)
    out_ref,            # [TB, Dout]                             (f32)
):
    # MXU operands in bf16; accumulate in f32; epilogue (bias/ReLU) in f32.
    xb = x_ref[...].astype(jnp.bfloat16)
    ab = a_ref[...].astype(jnp.bfloat16)

    # Encoder: Linear(CHW + A -> H1) + ReLU, Linear(H1 -> L)
    h1 = (jnp.dot(xb, w1x_ref[...], preferred_element_type=jnp.float32)
          + jnp.dot(ab, w1a_ref[...], preferred_element_type=jnp.float32)
          + b1_ref[...])
    h1 = jnp.maximum(h1, 0.0)
    z = (jnp.dot(h1.astype(jnp.bfloat16), w2_ref[...],
                 preferred_element_type=jnp.float32) + b2_ref[...])

    # Decoder: Linear(L -> H1) + ReLU, Linear(H1 -> Dout)
    h2 = (jnp.dot(z.astype(jnp.bfloat16), w3_ref[...],
                  preferred_element_type=jnp.float32) + b3_ref[...])
    h2 = jnp.maximum(h2, 0.0)
    y = (jnp.dot(h2.astype(jnp.bfloat16), w4_ref[...],
                 preferred_element_type=jnp.float32) + b4_ref[...])

    out_ref[...] = y.astype(out_ref.dtype)


# ---------------------------------------------------------------------------
# Wrapper
# ---------------------------------------------------------------------------
def _round_up(n, m):
    return ((n + m - 1) // m) * m


def prepare_params(params, chw):
    """One-time weight preprocessing: split w1 and cast matmul weights to bf16."""
    w1, b1, w2, b2, w3, b3, w4, b4 = params
    return (
        w1[:chw].astype(jnp.bfloat16),   # w1x
        w1[chw:].astype(jnp.bfloat16),   # w1a
        b1.astype(jnp.float32),
        w2.astype(jnp.bfloat16), b2.astype(jnp.float32),
        w3.astype(jnp.bfloat16), b3.astype(jnp.float32),
        w4.astype(jnp.bfloat16), b4.astype(jnp.float32),
    )


def autoencoder_forward(x_nchw, action, prepared):
    """x_nchw: [B, C, H, W] float32, action: [B, A] float32, prepared: see prepare_params."""
    B, C, H, W = x_nchw.shape
    CHW = C * H * W
    A = action.shape[1]
    x_flat = x_nchw.reshape(B, CHW)

    w1x, w1a, b1, w2b, b2, w3b, b3, w4b, b4 = prepared
    D_OUT = w4b.shape[1]

    # Batch tiling: pad rows to a multiple of 8 (f32 sublane), tile at <=128.
    TB = 128 if B >= 128 else _round_up(B, 8)
    B_pad = _round_up(B, TB)
    pad = B_pad - B
    if pad:
        x_flat = jnp.pad(x_flat, ((0, pad), (0, 0)))
        action = jnp.pad(action, ((0, pad), (0, 0)))

    def row_spec(width):
        return pl.BlockSpec((TB, width), lambda i: (i, 0))

    def resident(arr):
        # Whole-array block, same block index for every grid step -> the weight
        # is DMA'd once and stays VMEM-resident across all batch tiles.
        return pl.BlockSpec(arr.shape, lambda i: (0, 0))

    out = pl.pallas_call(
        autoencoder_kernel,
        out_shape=jax.ShapeDtypeStruct((B_pad, D_OUT), jnp.float32),
        grid=(B_pad // TB,),
        in_specs=[
            row_spec(CHW),          # x tile
            row_spec(A),            # action tile
            resident(w1x), resident(w1a), resident(b1),
            resident(w2b), resident(b2),
            resident(w3b), resident(b3),
            resident(w4b), resident(b4),
        ],
        out_specs=pl.BlockSpec((TB, D_OUT), lambda i: (i, 0)),
        compiler_params=pltpu.CompilerParams(
            dimension_semantics=("parallel",),
            vmem_limit_bytes=32 * 1024 * 1024,
        ),
    )(x_flat, action, w1x, w1a, b1, w2b, b2, w3b, b3, w4b, b4)

    return out[:B].reshape(B, C, H, W)


# ---------------------------------------------------------------------------
# Deterministic parameter init (matches nn.Linear uniform init shape-wise)
# ---------------------------------------------------------------------------
def init_params(key, d_in, hidden, latent, d_out):
    def linear(key, fan_in, fan_out):
        kw, kb = jax.random.split(key)
        bound = 1.0 / jnp.sqrt(fan_in)
        w = jax.random.uniform(kw, (fan_in, fan_out), jnp.float32, -bound, bound)
        b = jax.random.uniform(kb, (1, fan_out), jnp.float32, -bound, bound)
        return w, b

    k1, k2, k3, k4 = jax.random.split(key, 4)
    w1, b1 = linear(k1, d_in, hidden)
    w2, b2 = linear(k2, hidden, latent)
    w3, b3 = linear(k3, latent, hidden)
    w4, b4 = linear(k4, hidden, d_out)
    return (w1, b1, w2, b2, w3, b3, w4, b4)


# Pure-JAX f32 reference for a correctness check
def reference_forward(x_nchw, action, params):
    B, C, H, W = x_nchw.shape
    xin = jnp.concatenate([x_nchw.reshape(B, -1), action], axis=-1)
    w1, b1, w2, b2, w3, b3, w4, b4 = params
    h1 = jnp.maximum(xin @ w1 + b1, 0.0)
    z = h1 @ w2 + b2
    h2 = jnp.maximum(z @ w3 + b3, 0.0)
    y = h2 @ w4 + b4
    return y.reshape(B, C, H, W)


if __name__ == "__main__":
    # Small shapes consistent with the forward signature (x, action)
    B, C, H, W = 2, 4, 16, 16
    A = 8                    # action dim
    HIDDEN = 128
    LATENT = 32
    D_IN = C * H * W + A
    D_OUT = C * H * W

    key = jax.random.PRNGKey(0)
    kx, ka, kp = jax.random.split(key, 3)
    x = jax.random.normal(kx, (B, C, H, W), jnp.float32)
    action = jax.random.normal(ka, (B, A), jnp.float32)
    params = init_params(kp, D_IN, HIDDEN, LATENT, D_OUT)

    prepared = prepare_params(params, C * H * W)   # one-time weight prep (bf16 + split)
    out = autoencoder_forward(x, action, prepared)
    out = jax.block_until_ready(out)

    ref = reference_forward(x, action, params)
    assert out.shape == (B, C, H, W)
    # bf16 MXU operands with f32 accumulation -> relaxed tolerance vs f32 ref.
    assert jnp.allclose(out, ref, atol=2e-2, rtol=2e-2), "mismatch vs JAX reference"

    print("KERNEL_OK")
</pallas_src>

<mosaic_0001>
module attributes {stable_mosaic.version = 11 : i64} {
  func.func @autoencoder_kernel(%arg0: i32, %arg1: memref<8x1024xf32, #tpu.memory_space<vmem>>, %arg2: memref<8x8xf32, #tpu.memory_space<vmem>>, %arg3: memref<1024x128xbf16, #tpu.memory_space<vmem>>, %arg4: memref<8x128xbf16, #tpu.memory_space<vmem>>, %arg5: memref<1x128xf32, #tpu.memory_space<vmem>>, %arg6: memref<128x32xbf16, #tpu.memory_space<vmem>>, %arg7: memref<1x32xf32, #tpu.memory_space<vmem>>, %arg8: memref<32x128xbf16, #tpu.memory_space<vmem>>, %arg9: memref<1x128xf32, #tpu.memory_space<vmem>>, %arg10: memref<128x1024xbf16, #tpu.memory_space<vmem>>, %arg11: memref<1x1024xf32, #tpu.memory_space<vmem>>, %arg12: memref<8x1024xf32, #tpu.memory_space<vmem>>) attributes {dimension_semantics = [#tpu.dimension_semantics<parallel>], iteration_bounds = array<i64: 1>, scalar_prefetch = 0 : i64, scratch_operands = 0 : i64, tpu.core_type = #tpu.core_type<tc>, window_params = [{transform_indices = @transform_0, window_bounds = array<i64: 8, 1024>}, {transform_indices = @transform_1, window_bounds = array<i64: 8, 8>}, {pipeline_mode = #tpu.pipeline_mode<synchronous>, transform_indices = @transform_2, window_bounds = array<i64: 1024, 128>}, {pipeline_mode = #tpu.pipeline_mode<synchronous>, transform_indices = @transform_3, window_bounds = array<i64: 8, 128>}, {pipeline_mode = #tpu.pipeline_mode<synchronous>, transform_indices = @transform_4, window_bounds = array<i64: 1, 128>}, {pipeline_mode = #tpu.pipeline_mode<synchronous>, transform_indices = @transform_5, window_bounds = array<i64: 128, 32>}, {pipeline_mode = #tpu.pipeline_mode<synchronous>, transform_indices = @transform_6, window_bounds = array<i64: 1, 32>}, {pipeline_mode = #tpu.pipeline_mode<synchronous>, transform_indices = @transform_7, window_bounds = array<i64: 32, 128>}, {pipeline_mode = #tpu.pipeline_mode<synchronous>, transform_indices = @transform_8, window_bounds = array<i64: 1, 128>}, {pipeline_mode = #tpu.pipeline_mode<synchronous>, transform_indices = @transform_9, window_bounds = array<i64: 128, 1024>}, {pipeline_mode = #tpu.pipeline_mode<synchronous>, transform_indices = @transform_10, window_bounds = array<i64: 1, 1024>}, {transform_indices = @transform_11, window_bounds = array<i64: 8, 1024>}]} {
    %c0 = arith.constant 0 : index
    %c0_0 = arith.constant 0 : index
    %0 = vector.load %arg1[%c0, %c0_0] : memref<8x1024xf32, #tpu.memory_space<vmem>>, vector<8x1024xf32>
    %1 = arith.truncf %0 : vector<8x1024xf32> to vector<8x1024xbf16>
    %c0_1 = arith.constant 0 : index
    %c0_2 = arith.constant 0 : index
    %2 = vector.load %arg2[%c0_1, %c0_2] : memref<8x8xf32, #tpu.memory_space<vmem>>, vector<8x8xf32>
    %3 = arith.truncf %2 : vector<8x8xf32> to vector<8x8xbf16>
    %c0_3 = arith.constant 0 : index
    %c0_4 = arith.constant 0 : index
    %4 = vector.load %arg3[%c0_3, %c0_4] : memref<1024x128xbf16, #tpu.memory_space<vmem>>, vector<1024x128xbf16>
    %cst = arith.constant dense<0.000000e+00> : vector<8x128xf32>
    %5 = tpu.matmul %1, %4, %cst {dimension_numbers = #tpu.dot_dimension_numbers<[1], [0], [0], [1], [0, 0, 1, 1], [], []>} : vector<8x1024xbf16>, vector<1024x128xbf16>, vector<8x128xf32> -> vector<8x128xf32>
    %c0_5 = arith.constant 0 : index
    %c0_6 = arith.constant 0 : index
    %6 = vector.load %arg4[%c0_5, %c0_6] : memref<8x128xbf16, #tpu.memory_space<vmem>>, vector<8x128xbf16>
    %cst_7 = arith.constant dense<0.000000e+00> : vector<8x128xf32>
    %7 = tpu.matmul %3, %6, %cst_7 {dimension_numbers = #tpu.dot_dimension_numbers<[1], [0], [0], [1], [0, 0, 1, 1], [], []>} : vector<8x8xbf16>, vector<8x128xbf16>, vector<8x128xf32> -> vector<8x128xf32>
    %8 = arith.addf %5, %7 : vector<8x128xf32>
    %c0_8 = arith.constant 0 : index
    %c0_9 = arith.constant 0 : index
    %9 = vector.load %arg5[%c0_8, %c0_9] : memref<1x128xf32, #tpu.memory_space<vmem>>, vector<1x128xf32>
    %10 = vector.broadcast %9 : vector<1x128xf32> to vector<8x128xf32>
    %11 = arith.addf %8, %10 : vector<8x128xf32>
    %cst_10 = arith.constant 0.000000e+00 : f32
    %12 = vector.broadcast %cst_10 : f32 to vector<8x128xf32>
    %13 = arith.maximumf %11, %12 : vector<8x128xf32>
    %14 = arith.truncf %13 : vector<8x128xf32> to vector<8x128xbf16>
    %c0_11 = arith.constant 0 : index
    %c0_12 = arith.constant 0 : index
    %15 = vector.load %arg6[%c0_11, %c0_12] : memref<128x32xbf16, #tpu.memory_space<vmem>>, vector<128x32xbf16>
    %cst_13 = arith.constant dense<0.000000e+00> : vector<8x32xf32>
    %16 = tpu.matmul %14, %15, %cst_13 {dimension_numbers = #tpu.dot_dimension_numbers<[1], [0], [0], [1], [0, 0, 1, 1], [], []>} : vector<8x128xbf16>, vector<128x32xbf16>, vector<8x32xf32> -> vector<8x32xf32>
    %c0_14 = arith.constant 0 : index
    %c0_15 = arith.constant 0 : index
    %17 = vector.load %arg7[%c0_14, %c0_15] : memref<1x32xf32, #tpu.memory_space<vmem>>, vector<1x32xf32>
    %18 = vector.broadcast %17 : vector<1x32xf32> to vector<8x32xf32>
    %19 = arith.addf %16, %18 : vector<8x32xf32>
    %20 = arith.truncf %19 : vector<8x32xf32> to vector<8x32xbf16>
    %c0_16 = arith.constant 0 : index
    %c0_17 = arith.constant 0 : index
    %21 = vector.load %arg8[%c0_16, %c0_17] : memref<32x128xbf16, #tpu.memory_space<vmem>>, vector<32x128xbf16>
    %cst_18 = arith.constant dense<0.000000e+00> : vector<8x128xf32>
    %22 = tpu.matmul %20, %21, %cst_18 {dimension_numbers = #tpu.dot_dimension_numbers<[1], [0], [0], [1], [0, 0, 1, 1], [], []>} : vector<8x32xbf16>, vector<32x128xbf16>, vector<8x128xf32> -> vector<8x128xf32>
    %c0_19 = arith.constant 0 : index
    %c0_20 = arith.constant 0 : index
    %23 = vector.load %arg9[%c0_19, %c0_20] : memref<1x128xf32, #tpu.memory_space<vmem>>, vector<1x128xf32>
    %24 = vector.broadcast %23 : vector<1x128xf32> to vector<8x128xf32>
    %25 = arith.addf %22, %24 : vector<8x128xf32>
    %cst_21 = arith.constant 0.000000e+00 : f32
    %26 = vector.broadcast %cst_21 : f32 to vector<8x128xf32>
    %27 = arith.maximumf %25, %26 : vector<8x128xf32>
    %28 = arith.truncf %27 : vector<8x128xf32> to vector<8x128xbf16>
    %c0_22 = arith.constant 0 : index
    %c0_23 = arith.constant 0 : index
    %29 = vector.load %arg10[%c0_22, %c0_23] : memref<128x1024xbf16, #tpu.memory_space<vmem>>, vector<128x1024xbf16>
    %cst_24 = arith.constant dense<0.000000e+00> : vector<8x1024xf32>
    %30 = tpu.matmul %28, %29, %cst_24 {dimension_numbers = #tpu.dot_dimension_numbers<[1], [0], [0], [1], [0, 0, 1, 1], [], []>} : vector<8x128xbf16>, vector<128x1024xbf16>, vector<8x1024xf32> -> vector<8x1024xf32>
    %c0_25 = arith.constant 0 : index
    %c0_26 = arith.constant 0 : index
    %31 = vector.load %arg11[%c0_25, %c0_26] : memref<1x1024xf32, #tpu.memory_space<vmem>>, vector<1x1024xf32>
    %32 = vector.broadcast %31 : vector<1x1024xf32> to vector<8x1024xf32>
    %33 = arith.addf %30, %32 : vector<8x1024xf32>
    %c0_27 = arith.constant 0 : index
    %c0_28 = arith.constant 0 : index
    %34 = vector.load %arg12[%c0_27, %c0_28] : memref<8x1024xf32, #tpu.memory_space<vmem>>, vector<8x1024xf32>
    tpu.vector_store %arg12[%c0_27, %c0_28], %33 {strides = array<i32>} : memref<8x1024xf32, #tpu.memory_space<vmem>>, vector<8x1024xf32>,
    return
  }
  func.func @transform_0(%arg0: i32) -> (i32, i32) {
    %c0_i32 = arith.constant 0 : i32
    %c0_i32_0 = arith.constant 0 : i32
    return %arg0, %c0_i32 : i32, i32
  }
  func.func @transform_1(%arg0: i32) -> (i32, i32) {
    %c0_i32 = arith.constant 0 : i32
    %c0_i32_0 = arith.constant 0 : i32
    return %arg0, %c0_i32 : i32, i32
  }
  func.func @transform_2(%arg0: i32) -> (i32, i32) {
    %c0_i32 = arith.constant 0 : i32
    %c0_i32_0 = arith.constant 0 : i32
    %c0_i32_1 = arith.constant 0 : i32
    return %c0_i32, %c0_i32_0 : i32, i32
  }
  func.func @transform_3(%arg0: i32) -> (i32, i32) {
    %c0_i32 = arith.constant 0 : i32
    %c0_i32_0 = arith.constant 0 : i32
    %c0_i32_1 = arith.constant 0 : i32
    return %c0_i32, %c0_i32_0 : i32, i32
  }
  func.func @transform_4(%arg0: i32) -> (i32, i32) {
    %c0_i32 = arith.constant 0 : i32
    %c0_i32_0 = arith.constant 0 : i32
    %c0_i32_1 = arith.constant 0 : i32
    return %c0_i32, %c0_i32_0 : i32, i32
  }
  func.func @transform_5(%arg0: i32) -> (i32, i32) {
    %c0_i32 = arith.constant 0 : i32
    %c0_i32_0 = arith.constant 0 : i32
    %c0_i32_1 = arith.constant 0 : i32
    return %c0_i32, %c0_i32_0 : i32, i32
  }
  func.func @transform_6(%arg0: i32) -> (i32, i32) {
    %c0_i32 = arith.constant 0 : i32
    %c0_i32_0 = arith.constant 0 : i32
    %c0_i32_1 = arith.constant 0 : i32
    return %c0_i32, %c0_i32_0 : i32, i32
  }
  func.func @transform_7(%arg0: i32) -> (i32, i32) {
    %c0_i32 = arith.constant 0 : i32
    %c0_i32_0 = arith.constant 0 : i32
    %c0_i32_1 = arith.constant 0 : i32
    return %c0_i32, %c0_i32_0 : i32, i32
  }
  func.func @transform_8(%arg0: i32) -> (i32, i32) {
    %c0_i32 = arith.constant 0 : i32
    %c0_i32_0 = arith.constant 0 : i32
    %c0_i32_1 = arith.constant 0 : i32
    return %c0_i32, %c0_i32_0 : i32, i32
  }
  func.func @transform_9(%arg0: i32) -> (i32, i32) {
    %c0_i32 = arith.constant 0 : i32
    %c0_i32_0 = arith.constant 0 : i32
    %c0_i32_1 = arith.constant 0 : i32
    return %c0_i32, %c0_i32_0 : i32, i32
  }
  func.func @transform_10(%arg0: i32) -> (i32, i32) {
    %c0_i32 = arith.constant 0 : i32
    %c0_i32_0 = arith.constant 0 : i32
    %c0_i32_1 = arith.constant 0 : i32
    return %c0_i32, %c0_i32_0 : i32, i32
  }
  func.func @transform_11(%arg0: i32) -> (i32, i32) {
    %c0_i32 = arith.constant 0 : i32
    %c0_i32_0 = arith.constant 0 : i32
    return %arg0, %c0_i32 : i32, i32
  }
}

</mosaic_0001>

<llo_original>
// kernel: tpu_custom_call.1
$region0: #{tpu_custom_call.1}
  #allocation0 [shape = 'u32[]', space=smem, size = 0x4, offset = 0x4, fixed_abs, tag = 'smem constant byte address 0x4 - core index']
  #allocation1 [shape = 'u32[72,128]{1,0:T(1,128)}', space=vmem, size = 0x9000, scoped, tag = 'internal scratch']
  %s0 = inlined_call_operand.vmem [shape: f32[8,1024], index: 0, kind: input, shape index: {}]
  %s1 = inlined_call_operand.hbm [shape: f32[8,8], index: 1, kind: input, shape index: {}]
  %s2 = inlined_call_operand.hbm [shape: bf16[1024,128], index: 2, kind: input, shape index: {}]
  %s3 = inlined_call_operand.hbm [shape: bf16[8,128], index: 3, kind: input, shape index: {}]
  %s4 = inlined_call_operand.hbm [shape: f32[1,128], index: 4, kind: input, shape index: {}]
  %s5 = inlined_call_operand.vmem [shape: bf16[128,32], index: 5, kind: input, shape index: {}]
  %s6 = inlined_call_operand.hbm [shape: f32[1,32], index: 6, kind: input, shape index: {}]
  %s7 = inlined_call_operand.vmem [shape: bf16[32,128], index: 7, kind: input, shape index: {}]
  %s8 = inlined_call_operand.hbm [shape: f32[1,128], index: 8, kind: input, shape index: {}]
  %s9 = inlined_call_operand.hbm [shape: bf16[128,1024], index: 9, kind: input, shape index: {}]
  %s10 = inlined_call_operand.vmem [shape: f32[1,1024], index: 10, kind: input, shape index: {}]
  %s11 = inlined_call_operand.hbm [shape: f32[8,1024], index: 11, kind: output, shape index: {}]
  %s12 = sld [smem:[#allocation0]]
  $region82: #{tpu_custom_call.1} parent=0
    _
  %s14 = ssub.s32 1, %s12
  %s15 = scalar_select 0, %s14, %s12
  $region1: #{tpu_custom_call.1} parent=0
    #allocation2 [shape = 'u8[4096]{0}', space=vmem, size = 0x1000, scoped, tag = 'input window, operand 1, single buffered']
    #allocation3 [shape = 's32[1]{0}', space=sflag, size = 0x4, scoped, tag = 'scoped memory for tpu_custom_call.1']
    #allocation4 [shape = 's32[1]{0}', space=sflag, size = 0x4, scoped, tag = 'scoped memory for tpu_custom_call.1']
    #allocation5 [shape = 'u8[262144]{0}', space=vmem, size = 0x40000, scoped, tag = 'input window, operand 2, single buffered']
    #allocation6 [shape = 's32[1]{0}', space=sflag, size = 0x4, scoped, tag = 'scoped memory for tpu_custom_call.1']
    #allocation7 [shape = 'u8[2048]{0}', space=vmem, size = 0x800, scoped, tag = 'input window, operand 3, single buffered']
    #allocation8 [shape = 'u8[512]{0}', space=vmem, size = 0x400, scoped, tag = 'input window, operand 4, single buffered']
    #allocation9 [shape = 's32[1]{0}', space=sflag, size = 0x4, scoped, tag = 'scoped memory for tpu_custom_call.1']
    #allocation10 [shape = 'u8[512]{0}', space=vmem, size = 0x400, scoped, tag = 'input window, operand 6, single buffered']
    #allocation11 [shape = 'u8[512]{0}', space=vmem, size = 0x400, scoped, tag = 'input window, operand 8, single buffered']
    #allocation12 [shape = 's32[1]{0}', space=sflag, size = 0x4, scoped, tag = 'scoped memory for tpu_custom_call.1']
    #allocation13 [shape = 'u8[262144]{0}', space=vmem, size = 0x40000, scoped, tag = 'input window, operand 9, single buffered']
    #allocation14 [shape = 'u8[32768]{0}', space=vmem, size = 0x8000, scoped, tag = 'output window, operand 0, single buffered']
    %16 = vsyncpa [#allocation3], 0
    %17 = vsyncpa [#allocation6], 0
    %18 = vsyncpa [#allocation9], 0
    %19 = vsyncpa [#allocation12], 0
    %20 = vsyncpa [#allocation4], 0
    // Predicated region
    $region2: #{tpu_custom_call.1} parent=1 // pred_check
      _
    $region3: #{tpu_custom_call.1} parent=1 // pred_check_branch
      %22 = sbr.rel (0) target = $region5
    $region4: #{tpu_custom_call.1} parent=1 // pred_region
      _
    $region5: #{tpu_custom_call.1} parent=1 // pred_fallthru
      _
    // Predicated region
    $region6: #{tpu_custom_call.1} parent=1 // pred_check
      _
    $region7: #{tpu_custom_call.1} parent=1 // pred_check_branch
      %24 = sbr.rel (0) target = $region9
    $region8: #{tpu_custom_call.1} parent=1 // pred_region
      %26 = vsyncadd [#allocation3], 0
      %s28 = sshll.u32 %s1, 4
      %s29 = int_to_ptr.hbm [resolvable:$true] %s28
      %s30 = sshll.u32 [#allocation2], 4
      %s31 = int_to_ptr.vmem [resolvable:$true] %s30
      %33 = dma.hbm_to_vmem [thread:$0]  %s29, 128, %s31, [#allocation3]
    $region9: #{tpu_custom_call.1} parent=1 // pred_fallthru
      _
    // Predicated region
    $region10: #{tpu_custom_call.1} parent=1 // pred_check
      _
    $region11: #{tpu_custom_call.1} parent=1 // pred_check_branch
      %35 = sbr.rel (0) target = $region13
    $region12: #{tpu_custom_call.1} parent=1 // pred_region
      %37 = vsyncadd [#allocation6], 0
      %s38 = sshll.u32 %s2, 4
      %s39 = int_to_ptr.hbm [resolvable:$true] %s38
      %s40 = sshll.u32 [#allocation5], 4
      %s41 = int_to_ptr.vmem [resolvable:$true] %s40
      %46 = dma.hbm_to_vmem [thread:$0]  %s39, 8192, %s41, [#allocation6], 64, 64, 4
    $region13: #{tpu_custom_call.1} parent=1 // pred_fallthru
      _
    // Predicated region
    $region14: #{tpu_custom_call.1} parent=1 // pred_check
      _
    $region15: #{tpu_custom_call.1} parent=1 // pred_check_branch
      %48 = sbr.rel (0) target = $region17
    $region16: #{tpu_custom_call.1} parent=1 // pred_region
      %50 = vsyncadd [#allocation6], 0
      %s52 = sshll.u32 %s3, 4
      %s53 = int_to_ptr.hbm [resolvable:$true] %s52
      %s54 = sshll.u32 [#allocation7], 4
      %s55 = int_to_ptr.vmem [resolvable:$true] %s54
      %57 = dma.hbm_to_vmem [thread:$0]  %s53, 64, %s55, [#allocation6]
    $region17: #{tpu_custom_call.1} parent=1 // pred_fallthru
      _
    // Predicated region
    $region18: #{tpu_custom_call.1} parent=1 // pred_check
      _
    $region19: #{tpu_custom_call.1} parent=1 // pred_check_branch
      %59 = sbr.rel (0) target = $region21
    $region20: #{tpu_custom_call.1} parent=1 // pred_region
      %61 = vsyncadd [#allocation9], 0
      %s63 = sshll.u32 %s4, 4
      %s64 = int_to_ptr.hbm [resolvable:$true] %s63
      %s65 = sshll.u32 [#allocation8], 4
      %s66 = int_to_ptr.vmem [resolvable:$true] %s65
      %68 = dma.hbm_to_vmem [thread:$0]  %s64, 16, %s66, [#allocation9]
    $region21: #{tpu_custom_call.1} parent=1 // pred_fallthru
      _
    // Predicated region
    $region22: #{tpu_custom_call.1} parent=1 // pred_check
      _
    $region23: #{tpu_custom_call.1} parent=1 // pred_check_branch
      %70 = sbr.rel (0) target = $region25
    $region24: #{tpu_custom_call.1} parent=1 // pred_region
      _
    $region25: #{tpu_custom_call.1} parent=1 // pred_fallthru
      _
    // Predicated region
    $region26: #{tpu_custom_call.1} parent=1 // pred_check
      _
    $region27: #{tpu_custom_call.1} parent=1 // pred_check_branch
      %72 = sbr.rel (0) target = $region29
    $region28: #{tpu_custom_call.1} parent=1 // pred_region
      %74 = vsyncadd [#allocation9], 0
      %s76 = sshll.u32 %s6, 4
      %s77 = int_to_ptr.hbm [resolvable:$true] %s76
      %s78 = sshll.u32 [#allocation10], 4
      %s79 = int_to_ptr.vmem [resolvable:$true] %s78
      %81 = dma.hbm_to_vmem [thread:$0]  %s77, 16, %s79, [#allocation9]
    $region29: #{tpu_custom_call.1} parent=1 // pred_fallthru
      _
    // Predicated region
    $region30: #{tpu_custom_call.1} parent=1 // pred_check
      _
    $region31: #{tpu_custom_call.1} parent=1 // pred_check_branch
      %83 = sbr.rel (0) target = $region33
    $region32: #{tpu_custom_call.1} parent=1 // pred_region
      _
    $region33: #{tpu_custom_call.1} parent=1 // pred_fallthru
      _
    // Predicated region
    $region34: #{tpu_custom_call.1} parent=1 // pred_check
      _
    $region35: #{tpu_custom_call.1} parent=1 // pred_check_branch
      %85 = sbr.rel (0) target = $region37
    $region36: #{tpu_custom_call.1} parent=1 // pred_region
      %87 = vsyncadd [#allocation12], 0
      %s89 = sshll.u32 %s8, 4
      %s90 = int_to_ptr.hbm [resolvable:$true] %s89
      %s91 = sshll.u32 [#allocation11], 4
      %s92 = int_to_ptr.vmem [resolvable:$true] %s91
      %94 = dma.hbm_to_vmem [thread:$0]  %s90, 16, %s92, [#allocation12]
    $region37: #{tpu_custom_call.1} parent=1 // pred_fallthru
      _
    // Predicated region
    $region38: #{tpu_custom_call.1} parent=1 // pred_check
      _
    $region39: #{tpu_custom_call.1} parent=1 // pred_check_branch
      %96 = sbr.rel (0) target = $region41
    $region40: #{tpu_custom_call.1} parent=1 // pred_region
      %98 = vsyncadd [#allocation12], 0
      %s99 = sshll.u32 %s9, 4
      %s100 = int_to_ptr.hbm [resolvable:$true] %s99
      %s101 = sshll.u32 [#allocation13], 4
      %s102 = int_to_ptr.vmem [resolvable:$true] %s101
      %107 = dma.hbm_to_vmem [thread:$0]  %s100, 8192, %s102, [#allocation12], 512, 512, 32
    $region41: #{tpu_custom_call.1} parent=1 // pred_fallthru
      _
    // Predicated region
    $region42: #{tpu_custom_call.1} parent=1 // pred_check
      _
    $region43: #{tpu_custom_call.1} parent=1 // pred_check_branch
      %109 = sbr.rel (0) target = $region45
    $region44: #{tpu_custom_call.1} parent=1 // pred_region
      _
    $region45: #{tpu_custom_call.1} parent=1 // pred_fallthru
      _
    // Predicated region
    $region46: #{tpu_custom_call.1} parent=1 // pred_check
      _
    $region47: #{tpu_custom_call.1} parent=1 // pred_check_branch
      %111 = sbr.rel (0) target = $region49
    $region48: #{tpu_custom_call.1} parent=1 // pred_region
      %113 = dma.done [#allocation3], 128
    $region49: #{tpu_custom_call.1} parent=1 // pred_fallthru
      _
    // Predicated region
    $region50: #{tpu_custom_call.1} parent=1 // pred_check
      _
    $region51: #{tpu_custom_call.1} parent=1 // pred_check_branch
      %115 = sbr.rel (0) target = $region53
    $region52: #{tpu_custom_call.1} parent=1 // pred_region
      %117 = dma.done [#allocation6], 8192
    $region53: #{tpu_custom_call.1} parent=1 // pred_fallthru
      _
    // Predicated region
    $region54: #{tpu_custom_call.1} parent=1 // pred_check
      _
    $region55: #{tpu_custom_call.1} parent=1 // pred_check_branch
      %119 = sbr.rel (0) target = $region57
    $region56: #{tpu_custom_call.1} parent=1 // pred_region
      %121 = dma.done [#allocation6], 64
    $region57: #{tpu_custom_call.1} parent=1 // pred_fallthru
      _
    // Predicated region
    $region58: #{tpu_custom_call.1} parent=1 // pred_check
      _
    $region59: #{tpu_custom_call.1} parent=1 // pred_check_branch
      %123 = sbr.rel (0) target = $region61
    $region60: #{tpu_custom_call.1} parent=1 // pred_region
      %125 = dma.done [#allocation9], 16
    $region61: #{tpu_custom_call.1} parent=1 // pred_fallthru
      _
    // Predicated region
    $region62: #{tpu_custom_call.1} parent=1 // pred_check
      _
    $region63: #{tpu_custom_call.1} parent=1 // pred_check_branch
      %127 = sbr.rel (0) target = $region65
    $region64: #{tpu_custom_call.1} parent=1 // pred_region
      %129 = dma.done [#allocation9], 16
    $region65: #{tpu_custom_call.1} parent=1 // pred_fallthru
      _
    // Predicated region
    $region66: #{tpu_custom_call.1} parent=1 // pred_check
      _
    $region67: #{tpu_custom_call.1} parent=1 // pred_check_branch
      %131 = sbr.rel (0) target = $region69
    $region68: #{tpu_custom_call.1} parent=1 // pred_region
      %133 = dma.done [#allocation12], 16
    $region69: #{tpu_custom_call.1} parent=1 // pred_fallthru
      _
    // Predicated region
    $region70: #{tpu_custom_call.1} parent=1 // pred_check
      _
    $region71: #{tpu_custom_call.1} parent=1 // pred_check_branch
      %135 = sbr.rel (0) target = $region73
    $region72: #{tpu_custom_call.1} parent=1 // pred_region
      %137 = dma.done [#allocation12], 8192
    $region73: #{tpu_custom_call.1} parent=1 // pred_fallthru
      _
    %v139 = vld [vmem:[%s0] sm:$0xff]
    %v140 = vld [vmem:[%s0 + $0x8] sm:$0xff]
    %v141 = vld [vmem:[%s0 + $0x10] sm:$0xff]
    %v142 = vld [vmem:[%s0 + $0x18] sm:$0xff]
    %v143 = vld [vmem:[%s0 + $0x20] sm:$0xff]
    %v144 = vld [vmem:[%s0 + $0x28] sm:$0xff]
    %v145 = vld [vmem:[%s0 + $0x30] sm:$0xff]
    %v146 = vld [vmem:[%s0 + $0x38] sm:$0xff]
    %v147 = vpack.c.bf16 %v139, %v139
    %v148 = vpack.c.bf16 %v140, %v140
    %v149 = vpack.c.bf16 %v141, %v141
    %v150 = vpack.c.bf16 %v142, %v142
    %v151 = vpack.c.bf16 %v143, %v143
    %v152 = vpack.c.bf16 %v144, %v144
    %v153 = vpack.c.bf16 %v145, %v145
    %v154 = vpack.c.bf16 %v146, %v146
    %v155 = vld [vmem:[#allocation2] sm:$0xff]
    %v156 = vpack.c.bf16 %v155, %v155
    %v157 = vld [vmem:[#allocation5] sm:$0xf]
    %v158 = vld [vmem:[#allocation5 + $0x4] sm:$0xf]
    %v159 = vld [vmem:[#allocation5 + $0x8] sm:$0xf]
    %v160 = vld [vmem:[#allocation5 + $0xc] sm:$0xf]
    %v161 = vld [vmem:[#allocation5 + $0x10] sm:$0xf]
    %v162 = vld [vmem:[#allocation5 + $0x14] sm:$0xf]
    %v163 = vld [vmem:[#allocation5 + $0x18] sm:$0xf]
    %v164 = vld [vmem:[#allocation5 + $0x1c] sm:$0xf]
    %v165 = vld [vmem:[#allocation5 + $0x20] sm:$0xf]
    %v166 = vld [vmem:[#allocation5 + $0x24] sm:$0xf]
    %v167 = vld [vmem:[#allocation5 + $0x28] sm:$0xf]
    %v168 = vld [vmem:[#allocation5 + $0x2c] sm:$0xf]
    %v169 = vld [vmem:[#allocation5 + $0x30] sm:$0xf]
    %v170 = vld [vmem:[#allocation5 + $0x34] sm:$0xf]
    %v171 = vld [vmem:[#allocation5 + $0x38] sm:$0xf]
    %v172 = vld [vmem:[#allocation5 + $0x3c] sm:$0xf]
    %v173 = vld [vmem:[#allocation5 + $0x40] sm:$0xf]
    %v174 = vld [vmem:[#allocation5 + $0x44] sm:$0xf]
    %v175 = vld [vmem:[#allocation5 + $0x48] sm:$0xf]
    %v176 = vld [vmem:[#allocation5 + $0x4c] sm:$0xf]
    %v177 = vld [vmem:[#allocation5 + $0x50] sm:$0xf]
    %v178 = vld [vmem:[#allocation5 + $0x54] sm:$0xf]
    %v179 = vld [vmem:[#allocation5 + $0x58] sm:$0xf]
    %v180 = vld [vmem:[#allocation5 + $0x5c] sm:$0xf]
    %v181 = vld [vmem:[#allocation5 + $0x60] sm:$0xf]
    %v182 = vld [vmem:[#allocation5 + $0x64] sm:$0xf]
    %v183 = vld [vmem:[#allocation5 + $0x68] sm:$0xf]
    %v184 = vld [vmem:[#allocation5 + $0x6c] sm:$0xf]
    %v185 = vld [vmem:[#allocation5 + $0x70] sm:$0xf]
    %v186 = vld [vmem:[#allocation5 + $0x74] sm:$0xf]
    %v187 = vld [vmem:[#allocation5 + $0x78] sm:$0xf]
    %v188 = vld [vmem:[#allocation5 + $0x7c] sm:$0xf]
    %v189 = vld [vmem:[#allocation5 + $0x80] sm:$0xf]
    %v190 = vld [vmem:[#allocation5 + $0x84] sm:$0xf]
    %v191 = vld [vmem:[#allocation5 + $0x88] sm:$0xf]
    %v192 = vld [vmem:[#allocation5 + $0x8c] sm:$0xf]
    %v193 = vld [vmem:[#allocation5 + $0x90] sm:$0xf]
    %v194 = vld [vmem:[#allocation5 + $0x94] sm:$0xf]
    %v195 = vld [vmem:[#allocation5 + $0x98] sm:$0xf]
    %v196 = vld [vmem:[#allocation5 + $0x9c] sm:$0xf]
    %v197 = vld [vmem:[#allocation5 + $0xa0] sm:$0xf]
    %v198 = vld [vmem:[#allocation5 + $0xa4] sm:$0xf]
    %v199 = vld [vmem:[#allocation5 + $0xa8] sm:$0xf]
    %v200 = vld [vmem:[#allocation5 + $0xac] sm:$0xf]
    %v201 = vld [vmem:[#allocation5 + $0xb0] sm:$0xf]
    %v202 = vld [vmem:[#allocation5 + $0xb4] sm:$0xf]
    %v203 = vld [vmem:[#allocation5 + $0xb8] sm:$0xf]
    %v204 = vld [vmem:[#allocation5 + $0xbc] sm:$0xf]
    %v205 = vld [vmem:[#allocation5 + $0xc0] sm:$0xf]
    %v206 = vld [vmem:[#allocation5 + $0xc4] sm:$0xf]
    %v207 = vld [vmem:[#allocation5 + $0xc8] sm:$0xf]
    %v208 = vld [vmem:[#allocation5 + $0xcc] sm:$0xf]
    %v209 = vld [vmem:[#allocation5 + $0xd0] sm:$0xf]
    %v210 = vld [vmem:[#allocation5 + $0xd4] sm:$0xf]
    %v211 = vld [vmem:[#allocation5 + $0xd8] sm:$0xf]
    %v212 = vld [vmem:[#allocation5 + $0xdc] sm:$0xf]
    %v213 = vld [vmem:[#allocation5 + $0xe0] sm:$0xf]
    %v214 = vld [vmem:[#allocation5 + $0xe4] sm:$0xf]
    %v215 = vld [vmem:[#allocation5 + $0xe8] sm:$0xf]
    %v216 = vld [vmem:[#allocation5 + $0xec] sm:$0xf]
    %v217 = vld [vmem:[#allocation5 + $0xf0] sm:$0xf]
    %v218 = vld [vmem:[#allocation5 + $0xf4] sm:$0xf]
    %v219 = vld [vmem:[#allocation5 + $0xf8] sm:$0xf]
    %v220 = vld [vmem:[#allocation5 + $0xfc] sm:$0xf]
    %v221 = vld [vmem:[#allocation5 + $0x100] sm:$0xf]
    %v222 = vld [vmem:[#allocation5 + $0x104] sm:$0xf]
    %v223 = vld [vmem:[#allocation5 + $0x108] sm:$0xf]
    %v224 = vld [vmem:[#allocation5 + $0x10c] sm:$0xf]
    %v225 = vld [vmem:[#allocation5 + $0x110] sm:$0xf]
    %v226 = vld [vmem:[#allocation5 + $0x114] sm:$0xf]
    %v227 = vld [vmem:[#allocation5 + $0x118] sm:$0xf]
    %v228 = vld [vmem:[#allocation5 + $0x11c] sm:$0xf]
    %v229 = vld [vmem:[#allocation5 + $0x120] sm:$0xf]
    %v230 = vld [vmem:[#allocation5 + $0x124] sm:$0xf]
    %v231 = vld [vmem:[#allocation5 + $0x128] sm:$0xf]
    %v232 = vld [vmem:[#allocation5 + $0x12c] sm:$0xf]
    %v233 = vld [vmem:[#allocation5 + $0x130] sm:$0xf]
    %v234 = vld [vmem:[#allocation5 + $0x134] sm:$0xf]
    %v235 = vld [vmem:[#allocation5 + $0x138] sm:$0xf]
    %v236 = vld [vmem:[#allocation5 + $0x13c] sm:$0xf]
    %v237 = vld [vmem:[#allocation5 + $0x140] sm:$0xf]
    %v238 = vld [vmem:[#allocation5 + $0x144] sm:$0xf]
    %v239 = vld [vmem:[#allocation5 + $0x148] sm:$0xf]
    %v240 = vld [vmem:[#allocation5 + $0x14c] sm:$0xf]
    %v241 = vld [vmem:[#allocation5 + $0x150] sm:$0xf]
    %v242 = vld [vmem:[#allocation5 + $0x154] sm:$0xf]
    %v243 = vld [vmem:[#allocation5 + $0x158] sm:$0xf]
    %v244 = vld [vmem:[#allocation5 + $0x15c] sm:$0xf]
    %v245 = vld [vmem:[#allocation5 + $0x160] sm:$0xf]
    %v246 = vld [vmem:[#allocation5 + $0x164] sm:$0xf]
    %v247 = vld [vmem:[#allocation5 + $0x168] sm:$0xf]
    %v248 = vld [vmem:[#allocation5 + $0x16c] sm:$0xf]
    %v249 = vld [vmem:[#allocation5 + $0x170] sm:$0xf]
    %v250 = vld [vmem:[#allocation5 + $0x174] sm:$0xf]
    %v251 = vld [vmem:[#allocation5 + $0x178] sm:$0xf]
    %v252 = vld [vmem:[#allocation5 + $0x17c] sm:$0xf]
    %v253 = vld [vmem:[#allocation5 + $0x180] sm:$0xf]
    %v254 = vld [vmem:[#allocation5 + $0x184] sm:$0xf]
    %v255 = vld [vmem:[#allocation5 + $0x188] sm:$0xf]
    %v256 = vld [vmem:[#allocation5 + $0x18c] sm:$0xf]
    %v257 = vld [vmem:[#allocation5 + $0x190] sm:$0xf]
    %v258 = vld [vmem:[#allocation5 + $0x194] sm:$0xf]
    %v259 = vld [vmem:[#allocation5 + $0x198] sm:$0xf]
    %v260 = vld [vmem:[#allocation5 + $0x19c] sm:$0xf]
    %v261 = vld [vmem:[#allocation5 + $0x1a0] sm:$0xf]
    %v262 = vld [vmem:[#allocation5 + $0x1a4] sm:$0xf]
    %v263 = vld [vmem:[#allocation5 + $0x1a8] sm:$0xf]
    %v264 = vld [vmem:[#allocation5 + $0x1ac] sm:$0xf]
    %v265 = vld [vmem:[#allocation5 + $0x1b0] sm:$0xf]
    %v266 = vld [vmem:[#allocation5 + $0x1b4] sm:$0xf]
    %v267 = vld [vmem:[#allocation5 + $0x1b8] sm:$0xf]
    %v268 = vld [vmem:[#allocation5 + $0x1bc] sm:$0xf]
    %v269 = vld [vmem:[#allocation5 + $0x1c0] sm:$0xf]
    %v270 = vld [vmem:[#allocation5 + $0x1c4] sm:$0xf]
    %v271 = vld [vmem:[#allocation5 + $0x1c8] sm:$0xf]
    %v272 = vld [vmem:[#allocation5 + $0x1cc] sm:$0xf]
    %v273 = vld [vmem:[#allocation5 + $0x1d0] sm:$0xf]
    %v274 = vld [vmem:[#allocation5 + $0x1d4] sm:$0xf]
    %v275 = vld [vmem:[#allocation5 + $0x1d8] sm:$0xf]
    %v276 = vld [vmem:[#allocation5 + $0x1dc] sm:$0xf]
    %v277 = vld [vmem:[#allocation5 + $0x1e0] sm:$0xf]
    %v278 = vld [vmem:[#allocation5 + $0x1e4] sm:$0xf]
    %v279 = vld [vmem:[#allocation5 + $0x1e8] sm:$0xf]
    %v280 = vld [vmem:[#allocation5 + $0x1ec] sm:$0xf]
    %v281 = vld [vmem:[#allocation5 + $0x1f0] sm:$0xf]
    %v282 = vld [vmem:[#allocation5 + $0x1f4] sm:$0xf]
    %v283 = vld [vmem:[#allocation5 + $0x1f8] sm:$0xf]
    %v284 = vld [vmem:[#allocation5 + $0x1fc] sm:$0xf]
    %v285 = vld [vmem:[#allocation7] sm:$0xf]
    %vm286 = vcmask 64512
    %v288 = vsel %vm286, %v156, 0
    %vm290 = vcmask 1043456
    %v292 = vsel %vm290, %v285, 0
    %294 = vmatpush.bf16.msra.mxu0 0
    %295 = vmatpush.bf16.msra.mxu0 0
    %296 = vmatpush.bf16.msra.mxu0 0
    %297 = vmatpush.bf16.msra.mxu0 0
    %298 = vmatpush.bf16.msra.mxu0 0
    %299 = vmatpush.bf16.msra.mxu0 0
    %300 = vmatpush.bf16.msra.mxu0 0
    %301 = vmatpush.bf16.msra.mxu0 %v292
    %302 = vmatmul.bf16.gmra.mxu0 %v288
    %v303 = vpop.f32.mrf.mxu0
    %v304 = vadd.f32 0.0, %v303
    %v305 = vpop.f32.mrf.mxu0
    %306 = vdwg.mxu0
    %v435 = vunpack.c.l.b16 %v157
    %v436 = vunpack.c.l.b16 %v158
    %v437 = vunpack.c.l.b16 %v159
    %v438 = vunpack.c.l.b16 %v160
    %v439 = vunpack.c.l.b16 %v161
    %v440 = vunpack.c.l.b16 %v162
    %v441 = vunpack.c.l.b16 %v163
    %v442 = vunpack.c.l.b16 %v164
    %v443 = vunpack.c.l.b16 %v165
    %v444 = vunpack.c.l.b16 %v166
    %v445 = vunpack.c.l.b16 %v167
    %v446 = vunpack.c.l.b16 %v168
    %v447 = vunpack.c.l.b16 %v169
    %v448 = vunpack.c.l.b16 %v170
    %v449 = vunpack.c.l.b16 %v171
    %v450 = vunpack.c.l.b16 %v172
    %v451 = vunpack.c.l.b16 %v173
    %v452 = vunpack.c.l.b16 %v174
    %v453 = vunpack.c.l.b16 %v175
    %v454 = vunpack.c.l.b16 %v176
    %v455 = vunpack.c.l.b16 %v177
    %v456 = vunpack.c.l.b16 %v178
    %v457 = vunpack.c.l.b16 %v179
    %v458 = vunpack.c.l.b16 %v180
    %v459 = vunpack.c.l.b16 %v181
    %v460 = vunpack.c.l.b16 %v182
    %v461 = vunpack.c.l.b16 %v183
    %v462 = vunpack.c.l.b16 %v184
    %v463 = vunpack.c.l.b16 %v185
    %v464 = vunpack.c.l.b16 %v186
    %v465 = vunpack.c.l.b16 %v187
    %v466 = vunpack.c.l.b16 %v188
    %v467 = vunpack.c.l.b16 %v189
    %v468 = vunpack.c.l.b16 %v190
    %v469 = vunpack.c.l.b16 %v191
    %v470 = vunpack.c.l.b16 %v192
    %v471 = vunpack.c.l.b16 %v193
    %v472 = vunpack.c.l.b16 %v194
    %v473 = vunpack.c.l.b16 %v195
    %v474 = vunpack.c.l.b16 %v196
    %v475 = vunpack.c.l.b16 %v197
    %v476 = vunpack.c.l.b16 %v198
    %v477 = vunpack.c.l.b16 %v199
    %v478 = vunpack.c.l.b16 %v200
    %v479 = vunpack.c.l.b16 %v201
    %v480 = vunpack.c.l.b16 %v202
    %v481 = vunpack.c.l.b16 %v203
    %v482 = vunpack.c.l.b16 %v204
    %v483 = vunpack.c.l.b16 %v205
    %v484 = vunpack.c.l.b16 %v206
    %v485 = vunpack.c.l.b16 %v207
    %v486 = vunpack.c.l.b16 %v208
    %v487 = vunpack.c.l.b16 %v209
    %v488 = vunpack.c.l.b16 %v210
    %v489 = vunpack.c.l.b16 %v211
    %v490 = vunpack.c.l.b16 %v212
    %v491 = vunpack.c.l.b16 %v213
    %v492 = vunpack.c.l.b16 %v214
    %v493 = vunpack.c.l.b16 %v215
    %v494 = vunpack.c.l.b16 %v216
    %v495 = vunpack.c.l.b16 %v217
    %v496 = vunpack.c.l.b16 %v218
    %v497 = vunpack.c.l.b16 %v219
    %v498 = vunpack.c.l.b16 %v220
    %v499 = vunpack.c.l.b16 %v221
    %v500 = vunpack.c.l.b16 %v222
    %v501 = vunpack.c.l.b16 %v223
    %v502 = vunpack.c.l.b16 %v224
    %v503 = vunpack.c.l.b16 %v225
    %v504 = vunpack.c.l.b16 %v226
    %v505 = vunpack.c.l.b16 %v227
    %v506 = vunpack.c.l.b16 %v228
    %v507 = vunpack.c.l.b16 %v229
    %v508 = vunpack.c.l.b16 %v230
    %v509 = vunpack.c.l.b16 %v231
    %v510 = vunpack.c.l.b16 %v232
    %v511 = vunpack.c.l.b16 %v233
    %v512 = vunpack.c.l.b16 %v234
    %v513 = vunpack.c.l.b16 %v235
    %v514 = vunpack.c.l.b16 %v236
    %v515 = vunpack.c.l.b16 %v237
    %v516 = vunpack.c.l.b16 %v238
    %v517 = vunpack.c.l.b16 %v239
    %v518 = vunpack.c.l.b16 %v240
    %v519 = vunpack.c.l.b16 %v241
    %v520 = vunpack.c.l.b16 %v242
    %v521 = vunpack.c.l.b16 %v243
    %v522 = vunpack.c.l.b16 %v244
    %v523 = vunpack.c.l.b16 %v245
    %v524 = vunpack.c.l.b16 %v246
    %v525 = vunpack.c.l.b16 %v247
    %v526 = vunpack.c.l.b16 %v248
    %v527 = vunpack.c.l.b16 %v249
    %v528 = vunpack.c.l.b16 %v250
    %v529 = vunpack.c.l.b16 %v251
    %v530 = vunpack.c.l.b16 %v252
    %v531 = vunpack.c.l.b16 %v253
    %v532 = vunpack.c.l.b16 %v254
    %v533 = vunpack.c.l.b16 %v255
    %v534 = vunpack.c.l.b16 %v256
    %v535 = vunpack.c.l.b16 %v257
    %v536 = vunpack.c.l.b16 %v258
    %v537 = vunpack.c.l.b16 %v259
    %v538 = vunpack.c.l.b16 %v260
    %v539 = vunpack.c.l.b16 %v261
    %v540 = vunpack.c.l.b16 %v262
    %v541 = vunpack.c.l.b16 %v263
    %v542 = vunpack.c.l.b16 %v264
    %v543 = vunpack.c.l.b16 %v265
    %v544 = vunpack.c.l.b16 %v266
    %v545 = vunpack.c.l.b16 %v267
    %v546 = vunpack.c.l.b16 %v268
    %v547 = vunpack.c.l.b16 %v269
    %v548 = vunpack.c.l.b16 %v270
    %v549 = vunpack.c.l.b16 %v271
    %v550 = vunpack.c.l.b16 %v272
    %v551 = vunpack.c.l.b16 %v273
    %v552 = vunpack.c.l.b16 %v274
    %v553 = vunpack.c.l.b16 %v275
    %v554 = vunpack.c.l.b16 %v276
    %v555 = vunpack.c.l.b16 %v277
    %v556 = vunpack.c.l.b16 %v278
    %v557 = vunpack.c.l.b16 %v279
    %v558 = vunpack.c.l.b16 %v280
    %v559 = vunpack.c.l.b16 %v281
    %v560 = vunpack.c.l.b16 %v282
    %v561 = vunpack.c.l.b16 %v283
    %v562 = vunpack.c.l.b16 %v284
    %v563 = vpack.c.b16 %v436, %v435
    %v564 = vpack.c.b16 %v438, %v437
    %v565 = vpack.c.b16 %v440, %v439
    %v566 = vpack.c.b16 %v442, %v441
    %v567 = vpack.c.b16 %v444, %v443
    %v568 = vpack.c.b16 %v446, %v445
    %v569 = vpack.c.b16 %v448, %v447
    %v570 = vpack.c.b16 %v450, %v449
    %v571 = vpack.c.b16 %v452, %v451
    %v572 = vpack.c.b16 %v454, %v453
    %v573 = vpack.c.b16 %v456, %v455
    %v574 = vpack.c.b16 %v458, %v457
    %v575 = vpack.c.b16 %v460, %v459
    %v576 = vpack.c.b16 %v462, %v461
    %v577 = vpack.c.b16 %v464, %v463
    %v578 = vpack.c.b16 %v466, %v465
    %v579 = vpack.c.b16 %v468, %v467
    %v580 = vpack.c.b16 %v470, %v469
    %v581 = vpack.c.b16 %v472, %v471
    %v582 = vpack.c.b16 %v474, %v473
    %v583 = vpack.c.b16 %v476, %v475
    %v584 = vpack.c.b16 %v478, %v477
    %v585 = vpack.c.b16 %v480, %v479
    %v586 = vpack.c.b16 %v482, %v481
    %v587 = vpack.c.b16 %v484, %v483
    %v588 = vpack.c.b16 %v486, %v485
    %v589 = vpack.c.b16 %v488, %v487
    %v590 = vpack.c.b16 %v490, %v489
    %v591 = vpack.c.b16 %v492, %v491
    %v592 = vpack.c.b16 %v494, %v493
    %v593 = vpack.c.b16 %v496, %v495
    %v594 = vpack.c.b16 %v498, %v497
    %v595 = vpack.c.b16 %v500, %v499
    %v596 = vpack.c.b16 %v502, %v501
    %v597 = vpack.c.b16 %v504, %v503
    %v598 = vpack.c.b16 %v506, %v505
    %v599 = vpack.c.b16 %v508, %v507
    %v600 = vpack.c.b16 %v510, %v509
    %v601 = vpack.c.b16 %v512, %v511
    %v602 = vpack.c.b16 %v514, %v513
    %v603 = vpack.c.b16 %v516, %v515
    %v604 = vpack.c.b16 %v518, %v517
    %v605 = vpack.c.b16 %v520, %v519
    %v606 = vpack.c.b16 %v522, %v521
    %v607 = vpack.c.b16 %v524, %v523
    %v608 = vpack.c.b16 %v526, %v525
    %v609 = vpack.c.b16 %v528, %v527
    %v610 = vpack.c.b16 %v530, %v529
    %v611 = vpack.c.b16 %v532, %v531
    %v612 = vpack.c.b16 %v534, %v533
    %v613 = vpack.c.b16 %v536, %v535
    %v614 = vpack.c.b16 %v538, %v537
    %v615 = vpack.c.b16 %v540, %v539
    %v616 = vpack.c.b16 %v542, %v541
    %v617 = vpack.c.b16 %v544, %v543
    %v618 = vpack.c.b16 %v546, %v545
    %v619 = vpack.c.b16 %v548, %v547
    %v620 = vpack.c.b16 %v550, %v549
    %v621 = vpack.c.b16 %v552, %v551
    %v622 = vpack.c.b16 %v554, %v553
    %v623 = vpack.c.b16 %v556, %v555
    %v624 = vpack.c.b16 %v558, %v557
    %v625 = vpack.c.b16 %v560, %v559
    %v626 = vpack.c.b16 %v562, %v561
    %691 = vmatpush.bf16.msra.mxu0 %v570
    %692 = vmatpush.bf16.msra.mxu0 %v569
    %693 = vmatpush.bf16.msra.mxu0 %v568
    %694 = vmatpush.bf16.msra.mxu0 %v567
    %695 = vmatpush.bf16.msra.mxu0 %v566
    %696 = vmatpush.bf16.msra.mxu0 %v565
    %697 = vmatpush.bf16.msra.mxu0 %v564
    %698 = vmatpush.bf16.msra.mxu0 %v563
    %699 = vmatmul.bf16.gmra.mxu0 %v147
    %v700 = vpop.f32.mrf.mxu0
    %v701 = vadd.f32 %v304, %v700
    %v702 = vpop.f32.mrf.mxu0
    %703 = vdwg.mxu0
    %704 = vmatpush.bf16.msra.mxu0 %v578
    %705 = vmatpush.bf16.msra.mxu0 %v577
    %706 = vmatpush.bf16.msra.mxu0 %v576
    %707 = vmatpush.bf16.msra.mxu0 %v575
    %708 = vmatpush.bf16.msra.mxu0 %v574
    %709 = vmatpush.bf16.msra.mxu0 %v573
    %710 = vmatpush.bf16.msra.mxu0 %v572
    %711 = vmatpush.bf16.msra.mxu0 %v571
    %712 = vmatmul.bf16.gmra.mxu0 %v148
    %v713 = vpop.f32.mrf.mxu0
    %v714 = vadd.f32 %v701, %v713
    %v715 = vpop.f32.mrf.mxu0
    %716 = vdwg.mxu0
    %717 = vmatpush.bf16.msra.mxu0 %v586
    %718 = vmatpush.bf16.msra.mxu0 %v585
    %719 = vmatpush.bf16.msra.mxu0 %v584
    %720 = vmatpush.bf16.msra.mxu0 %v583
    %721 = vmatpush.bf16.msra.mxu0 %v582
    %722 = vmatpush.bf16.msra.mxu0 %v581
    %723 = vmatpush.bf16.msra.mxu0 %v580
    %724 = vmatpush.bf16.msra.mxu0 %v579
    %725 = vmatmul.bf16.gmra.mxu0 %v149
    %v726 = vpop.f32.mrf.mxu0
    %v727 = vadd.f32 %v714, %v726
    %v728 = vpop.f32.mrf.mxu0
    %729 = vdwg.mxu0
    %730 = vmatpush.bf16.msra.mxu0 %v594
    %731 = vmatpush.bf16.msra.mxu0 %v593
    %732 = vmatpush.bf16.msra.mxu0 %v592
    %733 = vmatpush.bf16.msra.mxu0 %v591
    %734 = vmatpush.bf16.msra.mxu0 %v590
    %735 = vmatpush.bf16.msra.mxu0 %v589
    %736 = vmatpush.bf16.msra.mxu0 %v588
    %737 = vmatpush.bf16.msra.mxu0 %v587
    %738 = vmatmul.bf16.gmra.mxu0 %v150
    %v739 = vpop.f32.mrf.mxu0
    %v740 = vadd.f32 %v727, %v739
    %v741 = vpop.f32.mrf.mxu0
    %742 = vdwg.mxu0
    %743 = vmatpush.bf16.msra.mxu0 %v602
    %744 = vmatpush.bf16.msra.mxu0 %v601
    %745 = vmatpush.bf16.msra.mxu0 %v600
    %746 = vmatpush.bf16.msra.mxu0 %v599
    %747 = vmatpush.bf16.msra.mxu0 %v598
    %748 = vmatpush.bf16.msra.mxu0 %v597
    %749 = vmatpush.bf16.msra.mxu0 %v596
    %750 = vmatpush.bf16.msra.mxu0 %v595
    %751 = vmatmul.bf16.gmra.mxu0 %v151
    %v752 = vpop.f32.mrf.mxu0
    %v753 = vadd.f32 %v740, %v752
    %v754 = vpop.f32.mrf.mxu0
    %755 = vdwg.mxu0
    %756 = vmatpush.bf16.msra.mxu0 %v610
    %757 = vmatpush.bf16.msra.mxu0 %v609
    %758 = vmatpush.bf16.msra.mxu0 %v608
    %759 = vmatpush.bf16.msra.mxu0 %v607
    %760 = vmatpush.bf16.msra.mxu0 %v606
    %761 = vmatpush.bf16.msra.mxu0 %v605
    %762 = vmatpush.bf16.msra.mxu0 %v604
    %763 = vmatpush.bf16.msra.mxu0 %v603
    %764 = vmatmul.bf16.gmra.mxu0 %v152
    %v765 = vpop.f32.mrf.mxu0
    %v766 = vadd.f32 %v753, %v765
    %v767 = vpop.f32.mrf.mxu0
    %768 = vdwg.mxu0
    %769 = vmatpush.bf16.msra.mxu0 %v618
    %770 = vmatpush.bf16.msra.mxu0 %v617
    %771 = vmatpush.bf16.msra.mxu0 %v616
    %772 = vmatpush.bf16.msra.mxu0 %v615
    %773 = vmatpush.bf16.msra.mxu0 %v614
    %774 = vmatpush.bf16.msra.mxu0 %v613
    %775 = vmatpush.bf16.msra.mxu0 %v612
    %776 = vmatpush.bf16.msra.mxu0 %v611
    %777 = vmatmul.bf16.gmra.mxu0 %v153
    %v778 = vpop.f32.mrf.mxu0
    %v779 = vadd.f32 %v766, %v778
    %v780 = vpop.f32.mrf.mxu0
    %781 = vdwg.mxu0
    %782 = vmatpush.bf16.msra.mxu0 %v626
    %783 = vmatpush.bf16.msra.mxu0 %v625
    %784 = vmatpush.bf16.msra.mxu0 %v624
    %785 = vmatpush.bf16.msra.mxu0 %v623
    %786 = vmatpush.bf16.msra.mxu0 %v622
    %787 = vmatpush.bf16.msra.mxu0 %v621
    %788 = vmatpush.bf16.msra.mxu0 %v620
    %789 = vmatpush.bf16.msra.mxu0 %v619
    %790 = vmatmul.bf16.gmra.mxu0 %v154
    %v791 = vpop.f32.mrf.mxu0
    %v792 = vadd.f32 %v779, %v791
    %v793 = vpop.f32.mrf.mxu0
    %794 = vdwg.mxu0
    %v795 = vld [vmem:[#allocation8] sm:$0x1]
    %v797 = vperm.slane %v795, 0
    %v799 = vadd.f32 %v792, %v797
    %v800 = vmax.f32 %v799, 0.0
    %v801 = vpack.c.bf16 %v800, %v800
    %v802 = vld [vmem:[%s5] sm:$0xf]
    %v803 = vld [vmem:[%s5 + $0x4] sm:$0xf]
    %v804 = vld [vmem:[%s5 + $0x8] sm:$0xf]
    %v805 = vld [vmem:[%s5 + $0xc] sm:$0xf]
    %v806 = vld [vmem:[%s5 + $0x10] sm:$0xf]
    %v807 = vld [vmem:[%s5 + $0x14] sm:$0xf]
    %v808 = vld [vmem:[%s5 + $0x18] sm:$0xf]
    %v809 = vld [vmem:[%s5 + $0x1c] sm:$0xf]
    %v810 = vld [vmem:[%s5 + $0x20] sm:$0xf]
    %v811 = vld [vmem:[%s5 + $0x24] sm:$0xf]
    %v812 = vld [vmem:[%s5 + $0x28] sm:$0xf]
    %v813 = vld [vmem:[%s5 + $0x2c] sm:$0xf]
    %v814 = vld [vmem:[%s5 + $0x30] sm:$0xf]
    %v815 = vld [vmem:[%s5 + $0x34] sm:$0xf]
    %v816 = vld [vmem:[%s5 + $0x38] sm:$0xf]
    %v817 = vld [vmem:[%s5 + $0x3c] sm:$0xf]
    %v818 = vld [vmem:[#allocation10] sm:$0x1]
    %v820 = vperm.slane %v818, 0
    %v838 = vunpack.c.l.b16 %v802
    %v839 = vunpack.c.l.b16 %v803
    %v840 = vunpack.c.l.b16 %v804
    %v841 = vunpack.c.l.b16 %v805
    %v842 = vunpack.c.l.b16 %v806
    %v843 = vunpack.c.l.b16 %v807
    %v844 = vunpack.c.l.b16 %v808
    %v845 = vunpack.c.l.b16 %v809
    %v846 = vunpack.c.l.b16 %v810
    %v847 = vunpack.c.l.b16 %v811
    %v848 = vunpack.c.l.b16 %v812
    %v849 = vunpack.c.l.b16 %v813
    %v850 = vunpack.c.l.b16 %v814
    %v851 = vunpack.c.l.b16 %v815
    %v852 = vunpack.c.l.b16 %v816
    %v853 = vunpack.c.l.b16 %v817
    %v854 = vpack.c.b16 %v839, %v838
    %v855 = vpack.c.b16 %v841, %v840
    %v856 = vpack.c.b16 %v843, %v842
    %v857 = vpack.c.b16 %v845, %v844
    %v858 = vpack.c.b16 %v847, %v846
    %v859 = vpack.c.b16 %v849, %v848
    %v860 = vpack.c.b16 %v851, %v850
    %v861 = vpack.c.b16 %v853, %v852
    %870 = vmatpush.bf16.msra.mxu0 %v861
    %871 = vmatpush.bf16.msra.mxu0 %v860
    %872 = vmatpush.bf16.msra.mxu0 %v859
    %873 = vmatpush.bf16.msra.mxu0 %v858
    %874 = vmatpush.bf16.msra.mxu0 %v857
    %875 = vmatpush.bf16.msra.mxu0 %v856
    %876 = vmatpush.bf16.msra.mxu0 %v855
    %877 = vmatpush.bf16.msra.mxu0 %v854
    %878 = vmatmul.bf16.gmra.mxu0 %v801
    %v879 = vpop.f32.mrf.mxu0
    %v880 = vadd.f32 %v820, %v879
    %v881 = vpop.f32.mrf.mxu0
    %882 = vdwg.mxu0
    %v883 = vpack.c.bf16 %v880, %v880
    %v884 = vld [vmem:[%s7] sm:$0xf]
    %v885 = vld [vmem:[%s7 + $0x4] sm:$0xf]
    %v886 = vld [vmem:[%s7 + $0x8] sm:$0xf]
    %v887 = vld [vmem:[%s7 + $0xc] sm:$0xf]
    %v888 = vld [vmem:[#allocation11] sm:$0x1]
    %v890 = vperm.slane %v888, 0
    %v896 = vunpack.c.l.b16 %v884
    %v897 = vunpack.c.l.b16 %v885
    %v898 = vunpack.c.l.b16 %v886
    %v899 = vunpack.c.l.b16 %v887
    %v900 = vpack.c.b16 %v897, %v896
    %v901 = vpack.c.b16 %v899, %v898
    %vm904 = vcmask 261120
    %v906 = vsel %vm904, %v883, 0
    %908 = vmatpush.bf16.msra.mxu0 0
    %909 = vmatpush.bf16.msra.mxu0 0
    %910 = vmatpush.bf16.msra.mxu0 0
    %911 = vmatpush.bf16.msra.mxu0 0
    %912 = vmatpush.bf16.msra.mxu0 0
    %913 = vmatpush.bf16.msra.mxu0 0
    %914 = vmatpush.bf16.msra.mxu0 %v901
    %915 = vmatpush.bf16.msra.mxu0 %v900
    %916 = vmatmul.bf16.gmra.mxu0 %v906
    %v917 = vpop.f32.mrf.mxu0
    %v918 = vadd.f32 %v890, %v917
    %v919 = vpop.f32.mrf.mxu0
    %920 = vdwg.mxu0
    %v921 = vmax.f32 %v918, 0.0
    %v922 = vpack.c.bf16 %v921, %v921
    %v923 = vld [vmem:[#allocation13] sm:$0xff]
    %v924 = vld [vmem:[#allocation13 + $0x8] sm:$0xff]
    %v925 = vld [vmem:[#allocation13 + $0x10] sm:$0xff]
    %v926 = vld [vmem:[#allocation13 + $0x18] sm:$0xff]
    %v927 = vld [vmem:[#allocation13 + $0x20] sm:$0xff]
    %v928 = vld [vmem:[#allocation13 + $0x28] sm:$0xff]
    %v929 = vld [vmem:[#allocation13 + $0x30] sm:$0xff]
    %v930 = vld [vmem:[#allocation13 + $0x38] sm:$0xff]
    %v931 = vld [vmem:[#allocation13 + $0x40] sm:$0xff]
    %v932 = vld [vmem:[#allocation13 + $0x48] sm:$0xff]
    %v933 = vld [vmem:[#allocation13 + $0x50] sm:$0xff]
    %v934 = vld [vmem:[#allocation13 + $0x58] sm:$0xff]
    %v935 = vld [vmem:[#allocation13 + $0x60] sm:$0xff]
    %v936 = vld [vmem:[#allocation13 + $0x68] sm:$0xff]
    %v937 = vld [vmem:[#allocation13 + $0x70] sm:$0xff]
    %v938 = vld [vmem:[#allocation13 + $0x78] sm:$0xff]
    %v939 = vld [vmem:[#allocation13 + $0x80] sm:$0xff]
    %v940 = vld [vmem:[#allocation13 + $0x88] sm:$0xff]
    %v941 = vld [vmem:[#allocation13 + $0x90] sm:$0xff]
    %v942 = vld [vmem:[#allocation13 + $0x98] sm:$0xff]
    %v943 = vld [vmem:[#allocation13 + $0xa0] sm:$0xff]
    %v944 = vld [vmem:[#allocation13 + $0xa8] sm:$0xff]
    %v945 = vld [vmem:[#allocation13 + $0xb0] sm:$0xff]
    %v946 = vld [vmem:[#allocation13 + $0xb8] sm:$0xff]
    %v947 = vld [vmem:[#allocation13 + $0xc0] sm:$0xff]
    %v948 = vld [vmem:[#allocation13 + $0xc8] sm:$0xff]
    %v949 = vld [vmem:[#allocation13 + $0xd0] sm:$0xff]
    %v950 = vld [vmem:[#allocation13 + $0xd8] sm:$0xff]
    %v951 = vld [vmem:[#allocation13 + $0xe0] sm:$0xff]
    %v952 = vld [vmem:[#allocation13 + $0xe8] sm:$0xff]
    %v953 = vld [vmem:[#allocation13 + $0xf0] sm:$0xff]
    %v954 = vld [vmem:[#allocation13 + $0xf8] sm:$0xff]
    %v955 = vld [vmem:[#allocation13 + $0x100] sm:$0xff]
    %v956 = vld [vmem:[#allocation13 + $0x108] sm:$0xff]
    %v957 = vld [vmem:[#allocation13 + $0x110] sm:$0xff]
    %v958 = vld [vmem:[#allocation13 + $0x118] sm:$0xff]
    %v959 = vld [vmem:[#allocation13 + $0x120] sm:$0xff]
    %v960 = vld [vmem:[#allocation13 + $0x128] sm:$0xff]
    %v961 = vld [vmem:[#allocation13 + $0x130] sm:$0xff]
    %v962 = vld [vmem:[#allocation13 + $0x138] sm:$0xff]
    %v963 = vld [vmem:[#allocation13 + $0x140] sm:$0xff]
    %v964 = vld [vmem:[#allocation13 + $0x148] sm:$0xff]
    %v965 = vld [vmem:[#allocation13 + $0x150] sm:$0xff]
    %v966 = vld [vmem:[#allocation13 + $0x158] sm:$0xff]
    %v967 = vld [vmem:[#allocation13 + $0x160] sm:$0xff]
    %v968 = vld [vmem:[#allocation13 + $0x168] sm:$0xff]
    %v969 = vld [vmem:[#allocation13 + $0x170] sm:$0xff]
    %v970 = vld [vmem:[#allocation13 + $0x178] sm:$0xff]
    %v971 = vld [vmem:[#allocation13 + $0x180] sm:$0xff]
    %v972 = vld [vmem:[#allocation13 + $0x188] sm:$0xff]
    %v973 = vld [vmem:[#allocation13 + $0x190] sm:$0xff]
    %v974 = vld [vmem:[#allocation13 + $0x198] sm:$0xff]
    %v975 = vld [vmem:[#allocation13 + $0x1a0] sm:$0xff]
    %v976 = vld [vmem:[#allocation13 + $0x1a8] sm:$0xff]
    %v977 = vld [vmem:[#allocation13 + $0x1b0] sm:$0xff]
    %v978 = vld [vmem:[#allocation13 + $0x1b8] sm:$0xff]
    %v979 = vld [vmem:[#allocation13 + $0x1c0] sm:$0xff]
    %v980 = vld [vmem:[#allocation13 + $0x1c8] sm:$0xff]
    %v981 = vld [vmem:[#allocation13 + $0x1d0] sm:$0xff]
    %v982 = vld [vmem:[#allocation13 + $0x1d8] sm:$0xff]
    %v983 = vld [vmem:[#allocation13 + $0x1e0] sm:$0xff]
    %v984 = vld [vmem:[#allocation13 + $0x1e8] sm:$0xff]
    %v985 = vld [vmem:[#allocation13 + $0x1f0] sm:$0xff]
    %v986 = vld [vmem:[#allocation13 + $0x1f8] sm:$0xff]
    %v987 = vld [vmem:[%s10] sm:$0xff]
    %v989 = vperm.slane %v987, 0
    %v990 = vperm.slane %v987, 1
    %v991 = vperm.slane %v987, 2
    %v992 = vperm.slane %v987, 3
    %v993 = vperm.slane %v987, 4
    %v994 = vperm.slane %v987, 5
    %v995 = vperm.slane %v987, 6
    %v996 = vperm.slane %v987, 7
    %v1069 = vunpack.c.l.b16 %v923
    %v1070 = vunpack.c.h.b16 %v923
    %v1071 = vunpack.c.l.b16 %v924
    %v1072 = vunpack.c.h.b16 %v924
    %v1073 = vunpack.c.l.b16 %v925
    %v1074 = vunpack.c.h.b16 %v925
    %v1075 = vunpack.c.l.b16 %v926
    %v1076 = vunpack.c.h.b16 %v926
    %v1077 = vunpack.c.l.b16 %v927
    %v1078 = vunpack.c.h.b16 %v927
    %v1079 = vunpack.c.l.b16 %v928
    %v1080 = vunpack.c.h.b16 %v928
    %v1081 = vunpack.c.l.b16 %v929
    %v1082 = vunpack.c.h.b16 %v929
    %v1083 = vunpack.c.l.b16 %v930
    %v1084 = vunpack.c.h.b16 %v930
    %v1085 = vunpack.c.l.b16 %v931
    %v1086 = vunpack.c.h.b16 %v931
    %v1087 = vunpack.c.l.b16 %v932
    %v1088 = vunpack.c.h.b16 %v932
    %v1089 = vunpack.c.l.b16 %v933
    %v1090 = vunpack.c.h.b16 %v933
    %v1091 = vunpack.c.l.b16 %v934
    %v1092 = vunpack.c.h.b16 %v934
    %v1093 = vunpack.c.l.b16 %v935
    %v1094 = vunpack.c.h.b16 %v935
    %v1095 = vunpack.c.l.b16 %v936
    %v1096 = vunpack.c.h.b16 %v936
    %v1097 = vunpack.c.l.b16 %v937
    %v1098 = vunpack.c.h.b16 %v937
    %v1099 = vunpack.c.l.b16 %v938
    %v1100 = vunpack.c.h.b16 %v938
    %v1101 = vunpack.c.l.b16 %v939
    %v1102 = vunpack.c.h.b16 %v939
    %v1103 = vunpack.c.l.b16 %v940
    %v1104 = vunpack.c.h.b16 %v940
    %v1105 = vunpack.c.l.b16 %v941
    %v1106 = vunpack.c.h.b16 %v941
    %v1107 = vunpack.c.l.b16 %v942
    %v1108 = vunpack.c.h.b16 %v942
    %v1109 = vunpack.c.l.b16 %v943
    %v1110 = vunpack.c.h.b16 %v943
    %v1111 = vunpack.c.l.b16 %v944
    %v1112 = vunpack.c.h.b16 %v944
    %v1113 = vunpack.c.l.b16 %v945
    %v1114 = vunpack.c.h.b16 %v945
    %v1115 = vunpack.c.l.b16 %v946
    %v1116 = vunpack.c.h.b16 %v946
    %v1117 = vunpack.c.l.b16 %v947
    %v1118 = vunpack.c.h.b16 %v947
    %v1119 = vunpack.c.l.b16 %v948
    %v1120 = vunpack.c.h.b16 %v948
    %v1121 = vunpack.c.l.b16 %v949
    %v1122 = vunpack.c.h.b16 %v949
    %v1123 = vunpack.c.l.b16 %v950
    %v1124 = vunpack.c.h.b16 %v950
    %v1125 = vunpack.c.l.b16 %v951
    %v1126 = vunpack.c.h.b16 %v951
    %v1127 = vunpack.c.l.b16 %v952
    %v1128 = vunpack.c.h.b16 %v952
    %v1129 = vunpack.c.l.b16 %v953
    %v1130 = vunpack.c.h.b16 %v953
    %v1131 = vunpack.c.l.b16 %v954
    %v1132 = vunpack.c.h.b16 %v954
    %v1133 = vunpack.c.l.b16 %v955
    %v1134 = vunpack.c.h.b16 %v955
    %v1135 = vunpack.c.l.b16 %v956
    %v1136 = vunpack.c.h.b16 %v956
    %v1137 = vunpack.c.l.b16 %v957
    %v1138 = vunpack.c.h.b16 %v957
    %v1139 = vunpack.c.l.b16 %v958
    %v1140 = vunpack.c.h.b16 %v958
    %v1141 = vunpack.c.l.b16 %v959
    %v1142 = vunpack.c.h.b16 %v959
    %v1143 = vunpack.c.l.b16 %v960
    %v1144 = vunpack.c.h.b16 %v960
    %v1145 = vunpack.c.l.b16 %v961
    %v1146 = vunpack.c.h.b16 %v961
    %v1147 = vunpack.c.l.b16 %v962
    %v1148 = vunpack.c.h.b16 %v962
    %v1149 = vunpack.c.l.b16 %v963
    %v1150 = vunpack.c.h.b16 %v963
    %v1151 = vunpack.c.l.b16 %v964
    %v1152 = vunpack.c.h.b16 %v964
    %v1153 = vunpack.c.l.b16 %v965
    %v1154 = vunpack.c.h.b16 %v965
    %v1155 = vunpack.c.l.b16 %v966
    %v1156 = vunpack.c.h.b16 %v966
    %v1157 = vunpack.c.l.b16 %v967
    %v1158 = vunpack.c.h.b16 %v967
    %v1159 = vunpack.c.l.b16 %v968
    %v1160 = vunpack.c.h.b16 %v968
    %v1161 = vunpack.c.l.b16 %v969
    %v1162 = vunpack.c.h.b16 %v969
    %v1163 = vunpack.c.l.b16 %v970
    %v1164 = vunpack.c.h.b16 %v970
    %v1165 = vunpack.c.l.b16 %v971
    %v1166 = vunpack.c.h.b16 %v971
    %v1167 = vunpack.c.l.b16 %v972
    %v1168 = vunpack.c.h.b16 %v972
    %v1169 = vunpack.c.l.b16 %v973
    %v1170 = vunpack.c.h.b16 %v973
    %v1171 = vunpack.c.l.b16 %v974
    %v1172 = vunpack.c.h.b16 %v974
    %v1173 = vunpack.c.l.b16 %v975
    %v1174 = vunpack.c.h.b16 %v975
    %v1175 = vunpack.c.l.b16 %v976
    %v1176 = vunpack.c.h.b16 %v976
    %v1177 = vunpack.c.l.b16 %v977
    %v1178 = vunpack.c.h.b16 %v977
    %v1179 = vunpack.c.l.b16 %v978
    %v1180 = vunpack.c.h.b16 %v978
    %v1181 = vunpack.c.l.b16 %v979
    %v1182 = vunpack.c.h.b16 %v979
    %v1183 = vunpack.c.l.b16 %v980
    %v1184 = vunpack.c.h.b16 %v980
    %v1185 = vunpack.c.l.b16 %v981
    %v1186 = vunpack.c.h.b16 %v981
    %v1187 = vunpack.c.l.b16 %v982
    %v1188 = vunpack.c.h.b16 %v982
    %v1189 = vunpack.c.l.b16 %v983
    %v1190 = vunpack.c.h.b16 %v983
    %v1191 = vunpack.c.l.b16 %v984
    %v1192 = vunpack.c.h.b16 %v984
    %v1193 = vunpack.c.l.b16 %v985
    %v1194 = vunpack.c.h.b16 %v985
    %v1195 = vunpack.c.l.b16 %v986
    %v1196 = vunpack.c.h.b16 %v986
    %v1197 = vpack.c.b16 %v1077, %v1069
    %v1198 = vpack.c.b16 %v1078, %v1070
    %v1199 = vpack.c.b16 %v1079, %v1071
    %v1200 = vpack.c.b16 %v1080, %v1072
    %v1201 = vpack.c.b16 %v1081, %v1073
    %v1202 = vpack.c.b16 %v1082, %v1074
    %v1203 = vpack.c.b16 %v1083, %v1075
    %v1204 = vpack.c.b16 %v1084, %v1076
    %v1205 = vpack.c.b16 %v1093, %v1085
    %v1206 = vpack.c.b16 %v1094, %v1086
    %v1207 = vpack.c.b16 %v1095, %v1087
    %v1208 = vpack.c.b16 %v1096, %v1088
    %v1209 = vpack.c.b16 %v1097, %v1089
    %v1210 = vpack.c.b16 %v1098, %v1090
    %v1211 = vpack.c.b16 %v1099, %v1091
    %v1212 = vpack.c.b16 %v1100, %v1092
    %v1213 = vpack.c.b16 %v1109, %v1101
    %v1214 = vpack.c.b16 %v1110, %v1102
    %v1215 = vpack.c.b16 %v1111, %v1103
    %v1216 = vpack.c.b16 %v1112, %v1104
    %v1217 = vpack.c.b16 %v1113, %v1105
    %v1218 = vpack.c.b16 %v1114, %v1106
    %v1219 = vpack.c.b16 %v1115, %v1107
    %v1220 = vpack.c.b16 %v1116, %v1108
    %v1221 = vpack.c.b16 %v1125, %v1117
    %v1222 = vpack.c.b16 %v1126, %v1118
    %v1223 = vpack.c.b16 %v1127, %v1119
    %v1224 = vpack.c.b16 %v1128, %v1120
    %v1225 = vpack.c.b16 %v1129, %v1121
    %v1226 = vpack.c.b16 %v1130, %v1122
    %v1227 = vpack.c.b16 %v1131, %v1123
    %v1228 = vpack.c.b16 %v1132, %v1124
    %v1229 = vpack.c.b16 %v1141, %v1133
    %v1230 = vpack.c.b16 %v1142, %v1134
    %v1231 = vpack.c.b16 %v1143, %v1135
    %v1232 = vpack.c.b16 %v1144, %v1136
    %v1233 = vpack.c.b16 %v1145, %v1137
    %v1234 = vpack.c.b16 %v1146, %v1138
    %v1235 = vpack.c.b16 %v1147, %v1139
    %v1236 = vpack.c.b16 %v1148, %v1140
    %v1237 = vpack.c.b16 %v1157, %v1149
    %v1238 = vpack.c.b16 %v1158, %v1150
    %v1239 = vpack.c.b16 %v1159, %v1151
    %v1240 = vpack.c.b16 %v1160, %v1152
    %v1241 = vpack.c.b16 %v1161, %v1153
    %v1242 = vpack.c.b16 %v1162, %v1154
    %v1243 = vpack.c.b16 %v1163, %v1155
    %v1244 = vpack.c.b16 %v1164, %v1156
    %v1245 = vpack.c.b16 %v1173, %v1165
    %v1246 = vpack.c.b16 %v1174, %v1166
    %v1247 = vpack.c.b16 %v1175, %v1167
    %v1248 = vpack.c.b16 %v1176, %v1168
    %v1249 = vpack.c.b16 %v1177, %v1169
    %v1250 = vpack.c.b16 %v1178, %v1170
    %v1251 = vpack.c.b16 %v1179, %v1171
    %v1252 = vpack.c.b16 %v1180, %v1172
    %v1253 = vpack.c.b16 %v1189, %v1181
    %v1254 = vpack.c.b16 %v1190, %v1182
    %v1255 = vpack.c.b16 %v1191, %v1183
    %v1256 = vpack.c.b16 %v1192, %v1184
    %v1257 = vpack.c.b16 %v1193, %v1185
    %v1258 = vpack.c.b16 %v1194, %v1186
    %v1259 = vpack.c.b16 %v1195, %v1187
    %v1260 = vpack.c.b16 %v1196, %v1188
    %1325 = vmatpush.bf16.msra.mxu0 %v1253
    %1326 = vmatpush.bf16.msra.mxu0 %v1245
    %1327 = vmatpush.bf16.msra.mxu0 %v1237
    %1328 = vmatpush.bf16.msra.mxu0 %v1229
    %1329 = vmatpush.bf16.msra.mxu0 %v1221
    %1330 = vmatpush.bf16.msra.mxu0 %v1213
    %1331 = vmatpush.bf16.msra.mxu0 %v1205
    %1332 = vmatpush.bf16.msra.mxu0 %v1197
    %1333 = vmatmul.bf16.gmra.mxu0 %v922
    %v1334 = vpop.f32.mrf.mxu0
    %v1335 = vadd.f32 %v989, %v1334
    %v1336 = vpop.f32.mrf.mxu0
    %1337 = vdwg.mxu0
    %1338 = vmatpush.bf16.msra.mxu0 %v1254
    %1339 = vmatpush.bf16.msra.mxu0 %v1246
    %1340 = vmatpush.bf16.msra.mxu0 %v1238
    %1341 = vmatpush.bf16.msra.mxu0 %v1230
    %1342 = vmatpush.bf16.msra.mxu0 %v1222
    %1343 = vmatpush.bf16.msra.mxu0 %v1214
    %1344 = vmatpush.bf16.msra.mxu0 %v1206
    %1345 = vmatpush.bf16.msra.mxu0 %v1198
    %1346 = vmatmul.bf16.gmra.mxu0 %v922
    %v1347 = vpop.f32.mrf.mxu0
    %v1348 = vadd.f32 %v990, %v1347
    %v1349 = vpop.f32.mrf.mxu0
    %1350 = vdwg.mxu0
    %1351 = vmatpush.bf16.msra.mxu0 %v1255
    %1352 = vmatpush.bf16.msra.mxu0 %v1247
    %1353 = vmatpush.bf16.msra.mxu0 %v1239
    %1354 = vmatpush.bf16.msra.mxu0 %v1231
    %1355 = vmatpush.bf16.msra.mxu0 %v1223
    %1356 = vmatpush.bf16.msra.mxu0 %v1215
    %1357 = vmatpush.bf16.msra.mxu0 %v1207
    %1358 = vmatpush.bf16.msra.mxu0 %v1199
    %1359 = vmatmul.bf16.gmra.mxu0 %v922
    %v1360 = vpop.f32.mrf.mxu0
    %v1361 = vadd.f32 %v991, %v1360
    %v1362 = vpop.f32.mrf.mxu0
    %1363 = vdwg.mxu0
    %1364 = vmatpush.bf16.msra.mxu0 %v1256
    %1365 = vmatpush.bf16.msra.mxu0 %v1248
    %1366 = vmatpush.bf16.msra.mxu0 %v1240
    %1367 = vmatpush.bf16.msra.mxu0 %v1232
    %1368 = vmatpush.bf16.msra.mxu0 %v1224
    %1369 = vmatpush.bf16.msra.mxu0 %v1216
    %1370 = vmatpush.bf16.msra.mxu0 %v1208
    %1371 = vmatpush.bf16.msra.mxu0 %v1200
    %1372 = vmatmul.bf16.gmra.mxu0 %v922
    %v1373 = vpop.f32.mrf.mxu0
    %v1374 = vadd.f32 %v992, %v1373
    %v1375 = vpop.f32.mrf.mxu0
    %1376 = vdwg.mxu0
    %1377 = vmatpush.bf16.msra.mxu0 %v1257
    %1378 = vmatpush.bf16.msra.mxu0 %v1249
    %1379 = vmatpush.bf16.msra.mxu0 %v1241
    %1380 = vmatpush.bf16.msra.mxu0 %v1233
    %1381 = vmatpush.bf16.msra.mxu0 %v1225
    %1382 = vmatpush.bf16.msra.mxu0 %v1217
    %1383 = vmatpush.bf16.msra.mxu0 %v1209
    %1384 = vmatpush.bf16.msra.mxu0 %v1201
    %1385 = vmatmul.bf16.gmra.mxu0 %v922
    %v1386 = vpop.f32.mrf.mxu0
    %v1387 = vadd.f32 %v993, %v1386
    %v1388 = vpop.f32.mrf.mxu0
    %1389 = vdwg.mxu0
    %1390 = vmatpush.bf16.msra.mxu0 %v1258
    %1391 = vmatpush.bf16.msra.mxu0 %v1250
    %1392 = vmatpush.bf16.msra.mxu0 %v1242
    %1393 = vmatpush.bf16.msra.mxu0 %v1234
    %1394 = vmatpush.bf16.msra.mxu0 %v1226
    %1395 = vmatpush.bf16.msra.mxu0 %v1218
    %1396 = vmatpush.bf16.msra.mxu0 %v1210
    %1397 = vmatpush.bf16.msra.mxu0 %v1202
    %1398 = vmatmul.bf16.gmra.mxu0 %v922
    %v1399 = vpop.f32.mrf.mxu0
    %v1400 = vadd.f32 %v994, %v1399
    %v1401 = vpop.f32.mrf.mxu0
    %1402 = vdwg.mxu0
    %1403 = vmatpush.bf16.msra.mxu0 %v1259
    %1404 = vmatpush.bf16.msra.mxu0 %v1251
    %1405 = vmatpush.bf16.msra.mxu0 %v1243
    %1406 = vmatpush.bf16.msra.mxu0 %v1235
    %1407 = vmatpush.bf16.msra.mxu0 %v1227
    %1408 = vmatpush.bf16.msra.mxu0 %v1219
    %1409 = vmatpush.bf16.msra.mxu0 %v1211
    %1410 = vmatpush.bf16.msra.mxu0 %v1203
    %1411 = vmatmul.bf16.gmra.mxu0 %v922
    %v1412 = vpop.f32.mrf.mxu0
    %v1413 = vadd.f32 %v995, %v1412
    %v1414 = vpop.f32.mrf.mxu0
    %1415 = vdwg.mxu0
    %1416 = vmatpush.bf16.msra.mxu0 %v1260
    %1417 = vmatpush.bf16.msra.mxu0 %v1252
    %1418 = vmatpush.bf16.msra.mxu0 %v1244
    %1419 = vmatpush.bf16.msra.mxu0 %v1236
    %1420 = vmatpush.bf16.msra.mxu0 %v1228
    %1421 = vmatpush.bf16.msra.mxu0 %v1220
    %1422 = vmatpush.bf16.msra.mxu0 %v1212
    %1423 = vmatpush.bf16.msra.mxu0 %v1204
    %1424 = vmatmul.bf16.gmra.mxu0 %v922
    %v1425 = vpop.f32.mrf.mxu0
    %v1426 = vadd.f32 %v996, %v1425
    %v1427 = vpop.f32.mrf.mxu0
    %1428 = vdwg.mxu0
    %1429 = vst [vmem:[#allocation14] sm:$0xff] %v1335
    %1430 = vst [vmem:[#allocation14 + $0x8] sm:$0xff] %v1348
    %1431 = vst [vmem:[#allocation14 + $0x10] sm:$0xff] %v1361
    %1432 = vst [vmem:[#allocation14 + $0x18] sm:$0xff] %v1374
    %1433 = vst [vmem:[#allocation14 + $0x20] sm:$0xff] %v1387
    %1434 = vst [vmem:[#allocation14 + $0x28] sm:$0xff] %v1400
    %1435 = vst [vmem:[#allocation14 + $0x30] sm:$0xff] %v1413
    %1436 = vst [vmem:[#allocation14 + $0x38] sm:$0xff] %v1426
    // Predicated region
    $region74: #{tpu_custom_call.1} parent=1 // pred_check
      _
    $region75: #{tpu_custom_call.1} parent=1 // pred_check_branch
      %1438 = sbr.rel (0) target = $region77
    $region76: #{tpu_custom_call.1} parent=1 // pred_region
      %1440 = vsyncadd [#allocation4], 0
      %s1442 = sshll.u32 [#allocation14], 4
      %s1443 = int_to_ptr.vmem [resolvable:$true] %s1442
      %s1444 = sshll.u32 %s11, 4
      %s1445 = int_to_ptr.hbm [resolvable:$true] %s1444
      %1447 = dma.vmem_to_hbm [thread:$0]  %s1443, 1024, %s1445, [#allocation4]
    $region77: #{tpu_custom_call.1} parent=1 // pred_fallthru
      _
    // Predicated region
    $region78: #{tpu_custom_call.1} parent=1 // pred_check
      _
    $region79: #{tpu_custom_call.1} parent=1 // pred_check_branch
      %1449 = sbr.rel (0) target = $region81
    $region80: #{tpu_custom_call.1} parent=1 // pred_region
      %1451 = dma.done [#allocation4], 1024
    $region81: #{tpu_custom_call.1} parent=1 // pred_fallthru
      _
    %1452 = vsyncpa [#allocation3], 1
    %1453 = vsyncpa [#allocation6], 1
    %1454 = vsyncpa [#allocation9], 1
    %1455 = vsyncpa [#allocation12], 1
    %1456 = vsyncpa [#allocation4], 1

</llo_original>
